<compile_context>
chip_gen: v7x
topology: tpu7x:2x2x1
jax: 0.10.0
libtpu: 0.0.40
codegen_flags: <defaults>
</compile_context>

<pallas_src>
import functools

import jax
import jax.numpy as jnp
from jax.experimental import pallas as pl
from jax.experimental.pallas import tpu as pltpu

_LANE = 128
_SUBLANE = 8
_PAD_PRED = -1e4  # exp(-|pad|) underflows to 0 exactly in f32 -> padded loss is exactly 0


def _bce_blur_kernel(pred_ref, true_ref, acc_ref, *, inv_alpha, valid_rows,
                     tiles_per_outer, tile_rows, full_tiles):
    i = pl.program_id(0)                      # "parallel" axis (megacore split)
    j = pl.program_id(1)                      # "arbitrary" reduction axis (acc resident)
    linear_tile = i * tiles_per_outer + j     # un-clamped logical tile index

    @pl.when(j == 0)
    def _init():
        acc_ref[...] = jnp.zeros_like(acc_ref)

    def partial_sum(x, t):
        # Numerically stable BCE-with-logits; e = exp(-|x|) feeds the log term.
        e = jnp.exp(-jnp.abs(x))
        bce = jnp.maximum(x, 0.0) - x * t + jnp.log1p(e)
        # sigmoid(x) via tanh: one EUP op, no divide/Newton on the VALU slot.
        p = 0.5 * jnp.tanh(0.5 * x) + 0.5
        alpha_factor = 1.0 - jnp.exp((p - t - 1.0) * inv_alpha)
        loss = bce * alpha_factor
        # Fold the (tile_rows,128) tile into the resident (8,128) accumulator with
        # sublane-aligned (layout no-op) reshape + vreg-wise VPU adds only.
        return jnp.sum(loss.reshape(tile_rows // _SUBLANE, _SUBLANE, _LANE), axis=0)

    # Fast path: every row of this tile is in bounds -> no mask work at all.
    @pl.when(linear_tile < full_tiles)
    def _fast():
        acc_ref[...] += partial_sum(pred_ref[...].astype(jnp.float32),
                                    true_ref[...].astype(jnp.float32))

    # Tail path: partially (or fully, for the dangling megacore step) out-of-bounds
    # tile.  Runs at most twice per kernel call, so the iota/where cost is negligible.
    @pl.when(linear_tile >= full_tiles)
    def _tail():
        row0 = linear_tile * tile_rows
        row_ids = row0 + jax.lax.broadcasted_iota(jnp.int32, (tile_rows, _LANE), 0)
        valid = row_ids < valid_rows
        # Invalid rows hold undefined data from the partial/clamped DMA; substitute
        # (pred=-1e4, true=0) whose loss is exactly 0 before any arithmetic touches it.
        x = jnp.where(valid, pred_ref[...].astype(jnp.float32), jnp.float32(_PAD_PRED))
        t = jnp.where(valid, true_ref[...].astype(jnp.float32), jnp.float32(0.0))
        acc_ref[...] += partial_sum(x, t)


def bce_blur_with_logits_loss(pred, true, *, alpha=0.05, tile_rows=2048):
    """Scalar-mean BCEBlur loss. pred/true: any matching shape (e.g. NCHW), any dtype."""
    assert pred.shape == true.shape
    n = pred.size
    inv_alpha = float(1.0 / (alpha + 1e-4))

    pred_flat = jnp.ravel(pred)   # keep caller dtype; upcast happens in-kernel
    true_flat = jnp.ravel(true)

    n_main = (n // _LANE) * _LANE          # largest lane-aligned prefix, no padding
    total = jnp.float32(0.0)

    if n_main > 0:
        rows = n_main // _LANE
        pred2d = pred_flat[:n_main].reshape(rows, _LANE)
        true2d = true_flat[:n_main].reshape(rows, _LANE)

        tr = min(int(tile_rows), rows)
        tr = max(tr, _SUBLANE)
        tr -= tr % _SUBLANE                 # multiple of 8 sublanes

        tiles_total = pl.cdiv(rows, tr)
        full_tiles = rows // tr             # tiles with every row in bounds
        # Split across the two TensorCores on megacore parts whenever there is more
        # than one tile; odd counts are covered by the clamped/masked dangling step.
        n_outer = 2 if tiles_total >= 2 else 1
        tiles_per_outer = pl.cdiv(tiles_total, n_outer)

        def idx_map(i, j):
            # Clamp so the dangling step of an odd tile count never issues a
            # fully-out-of-bounds DMA; the kernel masks it to a zero contribution.
            return (jnp.minimum(i * tiles_per_outer + j, tiles_total - 1), 0)

        in_bytes = (pred2d.size * pred2d.dtype.itemsize
                    + true2d.size * true2d.dtype.itemsize)
        cost = pl.CostEstimate(
            flops=16 * n_main,
            transcendentals=4 * n_main,
            bytes_accessed=in_bytes + n_outer * _SUBLANE * _LANE * 4,
        )

        kernel = functools.partial(
            _bce_blur_kernel,
            inv_alpha=inv_alpha,
            valid_rows=rows,
            tiles_per_outer=tiles_per_outer,
            tile_rows=tr,
            full_tiles=full_tiles,
        )

        partials = pl.pallas_call(
            kernel,
            out_shape=jax.ShapeDtypeStruct((n_outer * _SUBLANE, _LANE), jnp.float32),
            grid_spec=pltpu.PrefetchScalarGridSpec(
                num_scalar_prefetch=0,
                grid=(n_outer, tiles_per_outer),
                in_specs=[
                    pl.BlockSpec((tr, _LANE), idx_map),
                    pl.BlockSpec((tr, _LANE), idx_map),
                ],
                out_specs=pl.BlockSpec((_SUBLANE, _LANE), lambda i, j: (i, 0)),
            ),
            compiler_params=pltpu.CompilerParams(
                dimension_semantics=("parallel", "arbitrary")),
            cost_estimate=cost,
        )(pred2d, true2d)

        total = total + jnp.sum(partials)

    n_tail = n - n_main
    if n_tail > 0:
        # <128 ragged elements: a handful of scalar JAX ops instead of re-padding
        # (and re-copying) the whole input in HBM.
        xt = pred_flat[n_main:].astype(jnp.float32)
        tt = true_flat[n_main:].astype(jnp.float32)
        bce = jnp.maximum(xt, 0.0) - xt * tt + jnp.log1p(jnp.exp(-jnp.abs(xt)))
        p = jax.nn.sigmoid(xt)
        af = 1.0 - jnp.exp((p - tt - 1.0) * inv_alpha)
        total = total + jnp.sum(bce * af)

    return total / jnp.float32(n)


def _reference(pred, true, alpha=0.05):
    """Pure-JAX reference of the PyTorch forward (for the correctness check)."""
    x = pred.astype(jnp.float32)
    t = true.astype(jnp.float32)
    bce = jnp.maximum(x, 0.0) - x * t + jnp.log1p(jnp.exp(-jnp.abs(x)))
    p = jax.nn.sigmoid(x)
    dx = p - t
    af = 1.0 - jnp.exp((dx - 1.0) / (alpha + 1e-4))
    return jnp.mean(bce * af)


if __name__ == "__main__":
    key = jax.random.PRNGKey(0)
    k_pred, k_true = jax.random.split(key)

    # Small NCHW-shaped logits / targets, as the loss would see from a conv head.
    pred = jax.random.normal(k_pred, (2, 4, 16, 16), dtype=jnp.float32)
    true = jax.random.bernoulli(k_true, 0.3, (2, 4, 16, 16)).astype(jnp.float32)

    out = bce_blur_with_logits_loss(pred, true, alpha=0.05)
    out = jax.block_until_ready(out)

    ref = _reference(pred, true, alpha=0.05)
    assert jnp.allclose(out, ref, rtol=5e-5, atol=1e-6), (out, ref)

    print("KERNEL_OK")
</pallas_src>

<mosaic_0001>
module attributes {stable_mosaic.version = 11 : i64} {
  func.func @_bce_blur_kernel(%arg0: i32, %arg1: i32, %arg2: memref<16x128xf32, #tpu.memory_space<vmem>>, %arg3: memref<16x128xf32, #tpu.memory_space<vmem>>, %arg4: memref<8x128xf32, #tpu.memory_space<vmem>>) attributes {dimension_semantics = [#tpu.dimension_semantics<parallel>, #tpu.dimension_semantics<arbitrary>], iteration_bounds = array<i64: 1, 1>, scalar_prefetch = 0 : i64, scratch_operands = 0 : i64, tpu.core_type = #tpu.core_type<tc>, window_params = [{transform_indices = @transform_0, window_bounds = array<i64: 16, 128>}, {transform_indices = @transform_1, window_bounds = array<i64: 16, 128>}, {transform_indices = @transform_2, window_bounds = array<i64: 8, 128>}]} {
    %c1_i32 = arith.constant 1 : i32
    %0 = arith.muli %arg0, %c1_i32 : i32
    %1 = arith.addi %0, %arg1 : i32
    %c0_i32 = arith.constant 0 : i32
    %2 = arith.cmpi eq, %arg1, %c0_i32 : i32
    %3 = arith.extui %2 : i1 to i32
    %c0_i32_0 = arith.constant 0 : i32
    %4 = arith.cmpi ne, %3, %c0_i32_0 : i32
    scf.if %4 {
      %cst = arith.constant 0.000000e+00 : f32
      %11 = vector.broadcast %cst : f32 to vector<8x128xf32>
      %c0 = arith.constant 0 : index
      %c0_5 = arith.constant 0 : index
      %12 = vector.load %arg4[%c0, %c0_5] : memref<8x128xf32, #tpu.memory_space<vmem>>, vector<8x128xf32>
      tpu.vector_store %arg4[%c0, %c0_5], %11 {strides = array<i32>} : memref<8x128xf32, #tpu.memory_space<vmem>>, vector<8x128xf32>,
    } else {
    }
    %c1_i32_1 = arith.constant 1 : i32
    %5 = arith.cmpi slt, %1, %c1_i32_1 : i32
    %6 = arith.extui %5 : i1 to i32
    %c0_i32_2 = arith.constant 0 : i32
    %7 = arith.cmpi ne, %6, %c0_i32_2 : i32
    scf.if %7 {
      %c0 = arith.constant 0 : index
      %c0_5 = arith.constant 0 : index
      %11 = vector.load %arg4[%c0, %c0_5] : memref<8x128xf32, #tpu.memory_space<vmem>>, vector<8x128xf32>
      %c0_6 = arith.constant 0 : index
      %c0_7 = arith.constant 0 : index
      %12 = vector.load %arg2[%c0_6, %c0_7] : memref<16x128xf32, #tpu.memory_space<vmem>>, vector<16x128xf32>
      %c0_8 = arith.constant 0 : index
      %c0_9 = arith.constant 0 : index
      %13 = vector.load %arg3[%c0_8, %c0_9] : memref<16x128xf32, #tpu.memory_space<vmem>>, vector<16x128xf32>
      %14 = math.absf %12 : vector<16x128xf32>
      %cst = arith.constant 0.000000e+00 : f32
      %15 = vector.broadcast %cst : f32 to vector<16x128xf32>
      %16 = arith.subf %15, %14 : vector<16x128xf32>
      %17 = math.exp %16 : vector<16x128xf32>
      %cst_10 = arith.constant 0.000000e+00 : f32
      %18 = vector.broadcast %cst_10 : f32 to vector<16x128xf32>
      %19 = arith.maximumf %12, %18 : vector<16x128xf32>
      %20 = arith.mulf %12, %13 : vector<16x128xf32>
      %21 = arith.subf %19, %20 : vector<16x128xf32>
      %22 = math.log1p %17 : vector<16x128xf32>
      %23 = arith.addf %21, %22 : vector<16x128xf32>
      %cst_11 = arith.constant 5.000000e-01 : f32
      %24 = vector.broadcast %cst_11 : f32 to vector<16x128xf32>
      %25 = arith.mulf %24, %12 : vector<16x128xf32>
      %26 = math.tanh %25 : vector<16x128xf32>
      %cst_12 = arith.constant 5.000000e-01 : f32
      %27 = vector.broadcast %cst_12 : f32 to vector<16x128xf32>
      %28 = arith.mulf %27, %26 : vector<16x128xf32>
      %cst_13 = arith.constant 5.000000e-01 : f32
      %29 = vector.broadcast %cst_13 : f32 to vector<16x128xf32>
      %30 = arith.addf %28, %29 : vector<16x128xf32>
      %31 = arith.subf %30, %13 : vector<16x128xf32>
      %cst_14 = arith.constant 1.000000e+00 : f32
      %32 = vector.broadcast %cst_14 : f32 to vector<16x128xf32>
      %33 = arith.subf %31, %32 : vector<16x128xf32>
      %cst_15 = arith.constant 19.9600792 : f32
      %34 = vector.broadcast %cst_15 : f32 to vector<16x128xf32>
      %35 = arith.mulf %33, %34 : vector<16x128xf32>
      %36 = math.exp %35 : vector<16x128xf32>
      %cst_16 = arith.constant 1.000000e+00 : f32
      %37 = vector.broadcast %cst_16 : f32 to vector<16x128xf32>
      %38 = arith.subf %37, %36 : vector<16x128xf32>
      %39 = arith.mulf %23, %38 : vector<16x128xf32>
      %40 = vector.shape_cast %39 : vector<16x128xf32> to vector<2x8x128xf32>
      %cst_17 = arith.constant dense<0.000000e+00> : vector<8x128xf32>
      %41 = vector.multi_reduction <add>, %40, %cst_17 [0] : vector<2x8x128xf32> to vector<8x128xf32>
      %42 = arith.addf %11, %41 : vector<8x128xf32>
      %c0_18 = arith.constant 0 : index
      %c0_19 = arith.constant 0 : index
      %43 = vector.load %arg4[%c0_18, %c0_19] : memref<8x128xf32, #tpu.memory_space<vmem>>, vector<8x128xf32>
      tpu.vector_store %arg4[%c0_18, %c0_19], %42 {strides = array<i32>} : memref<8x128xf32, #tpu.memory_space<vmem>>, vector<8x128xf32>,
    } else {
    }
    %c1_i32_3 = arith.constant 1 : i32
    %8 = arith.cmpi sge, %1, %c1_i32_3 : i32
    %9 = arith.extui %8 : i1 to i32
    %c0_i32_4 = arith.constant 0 : i32
    %10 = arith.cmpi ne, %9, %c0_i32_4 : i32
    scf.if %10 {
      %c16_i32 = arith.constant 16 : i32
      %11 = arith.muli %1, %c16_i32 : i32
      %12 = tpu.iota {dimensions = array<i32: 0>} : vector<16x128xi32>
      %13 = vector.broadcast %11 : i32 to vector<16x128xi32>
      %14 = arith.addi %13, %12 : vector<16x128xi32>
      %c16_i32_5 = arith.constant 16 : i32
      %15 = vector.broadcast %c16_i32_5 : i32 to vector<16x128xi32>
      %16 = arith.cmpi slt, %14, %15 : vector<16x128xi32>
      %c0 = arith.constant 0 : index
      %c0_6 = arith.constant 0 : index
      %17 = vector.load %arg2[%c0, %c0_6] : memref<16x128xf32, #tpu.memory_space<vmem>>, vector<16x128xf32>
      %cst = arith.constant -1.000000e+04 : f32
      %18 = vector.broadcast %cst : f32 to vector<16x128xf32>
      %19 = arith.select %16, %17, %18 : vector<16x128xi1>, vector<16x128xf32>
      %c0_7 = arith.constant 0 : index
      %c0_8 = arith.constant 0 : index
      %20 = vector.load %arg3[%c0_7, %c0_8] : memref<16x128xf32, #tpu.memory_space<vmem>>, vector<16x128xf32>
      %cst_9 = arith.constant 0.000000e+00 : f32
      %21 = vector.broadcast %cst_9 : f32 to vector<16x128xf32>
      %22 = arith.select %16, %20, %21 : vector<16x128xi1>, vector<16x128xf32>
      %c0_10 = arith.constant 0 : index
      %c0_11 = arith.constant 0 : index
      %23 = vector.load %arg4[%c0_10, %c0_11] : memref<8x128xf32, #tpu.memory_space<vmem>>, vector<8x128xf32>
      %24 = math.absf %19 : vector<16x128xf32>
      %cst_12 = arith.constant 0.000000e+00 : f32
      %25 = vector.broadcast %cst_12 : f32 to vector<16x128xf32>
      %26 = arith.subf %25, %24 : vector<16x128xf32>
      %27 = math.exp %26 : vector<16x128xf32>
      %cst_13 = arith.constant 0.000000e+00 : f32
      %28 = vector.broadcast %cst_13 : f32 to vector<16x128xf32>
      %29 = arith.maximumf %19, %28 : vector<16x128xf32>
      %30 = arith.mulf %19, %22 : vector<16x128xf32>
      %31 = arith.subf %29, %30 : vector<16x128xf32>
      %32 = math.log1p %27 : vector<16x128xf32>
      %33 = arith.addf %31, %32 : vector<16x128xf32>
      %cst_14 = arith.constant 5.000000e-01 : f32
      %34 = vector.broadcast %cst_14 : f32 to vector<16x128xf32>
      %35 = arith.mulf %34, %19 : vector<16x128xf32>
      %36 = math.tanh %35 : vector<16x128xf32>
      %cst_15 = arith.constant 5.000000e-01 : f32
      %37 = vector.broadcast %cst_15 : f32 to vector<16x128xf32>
      %38 = arith.mulf %37, %36 : vector<16x128xf32>
      %cst_16 = arith.constant 5.000000e-01 : f32
      %39 = vector.broadcast %cst_16 : f32 to vector<16x128xf32>
      %40 = arith.addf %38, %39 : vector<16x128xf32>
      %41 = arith.subf %40, %22 : vector<16x128xf32>
      %cst_17 = arith.constant 1.000000e+00 : f32
      %42 = vector.broadcast %cst_17 : f32 to vector<16x128xf32>
      %43 = arith.subf %41, %42 : vector<16x128xf32>
      %cst_18 = arith.constant 19.9600792 : f32
      %44 = vector.broadcast %cst_18 : f32 to vector<16x128xf32>
      %45 = arith.mulf %43, %44 : vector<16x128xf32>
      %46 = math.exp %45 : vector<16x128xf32>
      %cst_19 = arith.constant 1.000000e+00 : f32
      %47 = vector.broadcast %cst_19 : f32 to vector<16x128xf32>
      %48 = arith.subf %47, %46 : vector<16x128xf32>
      %49 = arith.mulf %33, %48 : vector<16x128xf32>
      %50 = vector.shape_cast %49 : vector<16x128xf32> to vector<2x8x128xf32>
      %cst_20 = arith.constant dense<0.000000e+00> : vector<8x128xf32>
      %51 = vector.multi_reduction <add>, %50, %cst_20 [0] : vector<2x8x128xf32> to vector<8x128xf32>
      %52 = arith.addf %23, %51 : vector<8x128xf32>
      %c0_21 = arith.constant 0 : index
      %c0_22 = arith.constant 0 : index
      %53 = vector.load %arg4[%c0_21, %c0_22] : memref<8x128xf32, #tpu.memory_space<vmem>>, vector<8x128xf32>
      tpu.vector_store %arg4[%c0_21, %c0_22], %52 {strides = array<i32>} : memref<8x128xf32, #tpu.memory_space<vmem>>, vector<8x128xf32>,
    } else {
    }
    return
  }
  func.func @transform_0(%arg0: i32, %arg1: i32) -> (i32, i32) {
    %c1_i32 = arith.constant 1 : i32
    %0 = arith.muli %arg0, %c1_i32 : i32
    %1 = arith.addi %0, %arg1 : i32
    %c0_i32 = arith.constant 0 : i32
    %2 = arith.minsi %1, %c0_i32 : i32
    %c0_i32_0 = arith.constant 0 : i32
    %c0_i32_1 = arith.constant 0 : i32
    return %2, %c0_i32_0 : i32, i32
  }
  func.func @transform_1(%arg0: i32, %arg1: i32) -> (i32, i32) {
    %c1_i32 = arith.constant 1 : i32
    %0 = arith.muli %arg0, %c1_i32 : i32
    %1 = arith.addi %0, %arg1 : i32
    %c0_i32 = arith.constant 0 : i32
    %2 = arith.minsi %1, %c0_i32 : i32
    %c0_i32_0 = arith.constant 0 : i32
    %c0_i32_1 = arith.constant 0 : i32
    return %2, %c0_i32_0 : i32, i32
  }
  func.func @transform_2(%arg0: i32, %arg1: i32) -> (i32, i32) {
    %c0_i32 = arith.constant 0 : i32
    %c0_i32_0 = arith.constant 0 : i32
    return %arg0, %c0_i32 : i32, i32
  }
}

</mosaic_0001>

<llo_original>
// kernel: tpu_custom_call.1
$region0: #{tpu_custom_call.1}
  #allocation0 [shape = 'u32[]', space=smem, size = 0x4, offset = 0x4, fixed_abs, tag = 'smem constant byte address 0x4 - core index']
  #allocation1 [shape = 'u32[144,128]{1,0:T(1,128)}', space=vmem, size = 0x12000, scoped, tag = 'internal scratch']
  %s0 = inlined_call_operand.hbm [shape: f32[16,128], index: 0, kind: input, shape index: {}]
  %s1 = inlined_call_operand.hbm [shape: f32[16,128], index: 1, kind: input, shape index: {}]
  %s2 = inlined_call_operand.hbm [shape: f32[8,128], index: 2, kind: output, shape index: {}]
  %s3 = sld [smem:[#allocation0]]
  $region38: #{tpu_custom_call.1} parent=0
    _
  %s5 = ssub.s32 1, %s3
  %s6 = scalar_select 0, %s5, %s3
  $region1: #{tpu_custom_call.1} parent=0
    #allocation2 [shape = 'u8[8192]{0}', space=vmem, size = 0x2000, scoped, tag = 'input window, operand 0, single buffered']
    #allocation3 [shape = 's32[1]{0}', space=sflag, size = 0x4, scoped, tag = 'scoped memory for tpu_custom_call.1']
    #allocation4 [shape = 's32[1]{0}', space=sflag, size = 0x4, scoped, tag = 'scoped memory for tpu_custom_call.1']
    #allocation5 [shape = 'u8[8192]{0}', space=vmem, size = 0x2000, scoped, tag = 'input window, operand 1, single buffered']
    #allocation6 [shape = 's32[1]{0}', space=sflag, size = 0x4, scoped, tag = 'scoped memory for tpu_custom_call.1']
    #allocation7 [shape = 'u8[4096]{0}', space=vmem, size = 0x1000, scoped, tag = 'output window, operand 0, single buffered']
    %7 = vsyncpa [#allocation3], 0
    %8 = vsyncpa [#allocation6], 0
    %9 = vsyncpa [#allocation4], 0
    // Predicated region
    $region2: #{tpu_custom_call.1} parent=1 // pred_check
      _
    $region3: #{tpu_custom_call.1} parent=1 // pred_check_branch
      %11 = sbr.rel (0) target = $region5
    $region4: #{tpu_custom_call.1} parent=1 // pred_region
      %s12 = sadd.s32 0, 0
      %p13 = scmp.lt.s32.totalorder %s12, 0
      %s14 = scalar_select %p13, %s12, 0
      %s15 = smul.u32 2, %s14
      %s17 = ssub.s32 256, 256
      %18 = vsyncadd [#allocation3], %s17
      %s19 = smul.addr %s15, 128
      %s20 = scalar_lea.hbm %s0, %s19
      %s21 = sshll.u32 [#allocation2], 4
      %s22 = int_to_ptr.vmem [resolvable:$true] %s21
      %27 = dma.hbm_to_vmem [thread:$0]  %s20, 256, %s22, [#allocation3], 128, 128, 8
    $region5: #{tpu_custom_call.1} parent=1 // pred_fallthru
      _
    // Predicated region
    $region6: #{tpu_custom_call.1} parent=1 // pred_check
      _
    $region7: #{tpu_custom_call.1} parent=1 // pred_check_branch
      %29 = sbr.rel (0) target = $region9
    $region8: #{tpu_custom_call.1} parent=1 // pred_region
      %s30 = sadd.s32 0, 0
      %p31 = scmp.lt.s32.totalorder %s30, 0
      %s32 = scalar_select %p31, %s30, 0
      %s33 = smul.u32 2, %s32
      %s35 = ssub.s32 256, 256
      %36 = vsyncadd [#allocation6], %s35
      %s37 = smul.addr %s33, 128
      %s38 = scalar_lea.hbm %s1, %s37
      %s39 = sshll.u32 [#allocation5], 4
      %s40 = int_to_ptr.vmem [resolvable:$true] %s39
      %45 = dma.hbm_to_vmem [thread:$0]  %s38, 256, %s40, [#allocation6], 128, 128, 8
    $region9: #{tpu_custom_call.1} parent=1 // pred_fallthru
      _
    // Predicated region
    $region10: #{tpu_custom_call.1} parent=1 // pred_check
      _
    $region11: #{tpu_custom_call.1} parent=1 // pred_check_branch
      %47 = sbr.rel (0) target = $region13
    $region12: #{tpu_custom_call.1} parent=1 // pred_region
      %48 = dma.done [#allocation3], 256
    $region13: #{tpu_custom_call.1} parent=1 // pred_fallthru
      _
    // Predicated region
    $region14: #{tpu_custom_call.1} parent=1 // pred_check
      _
    $region15: #{tpu_custom_call.1} parent=1 // pred_check_branch
      %50 = sbr.rel (0) target = $region17
    $region16: #{tpu_custom_call.1} parent=1 // pred_region
      %51 = dma.done [#allocation6], 256
    $region17: #{tpu_custom_call.1} parent=1 // pred_fallthru
      _
    %s52 = sadd.s32 0, 0
    %p53 = scmp.lt.s32.totalorder %s52, 0
    %s54 = scalar_select %p53, %s52, 0
    %s55 = smul.u32 2, %s54
    %s56 = sadd.s32 0, 0
    %p57 = scmp.lt.s32.totalorder %s56, 0
    %s58 = scalar_select %p57, %s56, 0
    %s59 = smul.u32 2, %s58
    %s60 = sadd.s32 0, 0
    %p61 = scmp.eq.s32.totalorder 0, 0
    // Predicated region
    $region18: #{tpu_custom_call.1} parent=1 // pred_check
      %p62 = pneg %p61
    $region19: #{tpu_custom_call.1} parent=1 // pred_check_branch
      %64 = sbr.rel (%p62) target = $region21
    $region20: #{tpu_custom_call.1} parent=1 // pred_region
      %65 = vst [vmem:[#allocation7] sm:$0xff] 0.0
    $region21: #{tpu_custom_call.1} parent=1 // pred_fallthru
      _
    %p66 = scmp.lt.s32.totalorder %s60, 1
    // Predicated region
    $region22: #{tpu_custom_call.1} parent=1 // pred_check
      %p67 = pneg %p66
    $region23: #{tpu_custom_call.1} parent=1 // pred_check_branch
      %69 = sbr.rel (%p67) target = $region25
    $region24: #{tpu_custom_call.1} parent=1 // pred_region
      %v70 = vld [vmem:[#allocation7] sm:$0xff]
      %v71 = vld [vmem:[#allocation2] sm:$0xff]
      %v72 = vld [vmem:[#allocation2 + $0x8] sm:$0xff]
      %v73 = vld [vmem:[#allocation5] sm:$0xff]
      %v74 = vld [vmem:[#allocation5 + $0x8] sm:$0xff]
      %v75 = vand.u32 2147483647, %v71
      %v76 = vand.u32 2147483647, %v72
      %v77 = vsub.f32 0.0, %v75
      %v78 = vsub.f32 0.0, %v76
      %v79 = vmul.f32 %v77, 1.442695
      %v80 = vpow.pop %v79
      %v81 = vmul.f32 %v78, 1.442695
      %v82 = vpow.pop %v81
      %v83 = vmax.f32 %v71, 0.0
      %v84 = vmax.f32 %v72, 0.0
      %v85 = vmul.f32 %v71, %v73
      %v86 = vmul.f32 %v72, %v74
      %v87 = vsub.f32 %v83, %v85
      %v88 = vsub.f32 %v84, %v86
      %v89 = vadd.f32 %v80, 1.0
      %v90 = vlog2.pop %v89
      %v91 = vmul.f32 %v90, 0.6931472
      %v92 = vmul.f32 -0.5, %v80
      %v93 = vadd.f32 %v92, 1.0
      %v94 = vmul.f32 %v93, %v80
      %v95 = vand.u32 2147483647, %v80
      %vm96 = vcmp.lt.f32.partialorder %v95, 0.0004427343
      %v97 = vsel %vm96, %v94, %v91
      %v98 = vadd.f32 %v82, 1.0
      %v99 = vlog2.pop %v98
      %v100 = vmul.f32 %v99, 0.6931472
      %v101 = vmul.f32 -0.5, %v82
      %v102 = vadd.f32 %v101, 1.0
      %v103 = vmul.f32 %v102, %v82
      %v104 = vand.u32 2147483647, %v82
      %vm105 = vcmp.lt.f32.partialorder %v104, 0.0004427343
      %v106 = vsel %vm105, %v103, %v100
      %v107 = vadd.f32 %v87, %v97
      %v108 = vadd.f32 %v88, %v106
      %v109 = vmul.f32 %v71, 0.5
      %v110 = vmul.f32 %v72, 0.5
      %v111 = vtanh.pop %v109
      %v112 = vtanh.pop %v110
      %v113 = vmul.f32 %v111, 0.5
      %v114 = vmul.f32 %v112, 0.5
      %v115 = vadd.f32 %v113, 0.5
      %v116 = vadd.f32 %v114, 0.5
      %v117 = vsub.f32 %v115, %v73
      %v118 = vsub.f32 %v116, %v74
      %v119 = vsub.f32 %v117, 1.0
      %v120 = vsub.f32 %v118, 1.0
      %v121 = vmul.f32 %v119, 19.96008
      %v122 = vmul.f32 %v120, 19.96008
      %v123 = vmul.f32 %v121, 1.442695
      %v124 = vpow.pop %v123
      %v125 = vmul.f32 %v122, 1.442695
      %v126 = vpow.pop %v125
      %v127 = vsub.f32 1.0, %v124
      %v128 = vsub.f32 1.0, %v126
      %v129 = vmul.f32 %v107, %v127
      %v130 = vmul.f32 %v108, %v128
      %v131 = vadd.f32 %v129, %v130
      %v132 = vadd.f32 %v70, %v131
      %133 = vst [vmem:[#allocation7] sm:$0xff] %v132
    $region25: #{tpu_custom_call.1} parent=1 // pred_fallthru
      _
    %p134 = scmp.ge.s32.totalorder %s60, 1
    // Predicated region
    $region26: #{tpu_custom_call.1} parent=1 // pred_check
      %p135 = pneg %p134
    $region27: #{tpu_custom_call.1} parent=1 // pred_check_branch
      %137 = sbr.rel (%p135) target = $region29
    $region28: #{tpu_custom_call.1} parent=1 // pred_region
      %s138 = smul.u32 %s60, 16
      %v139 = vlaneseq
      %v140 = vshrl.u32 %v139, 7
      %v141 = vadd.s32 %v140, 8
      %v142 = vstv %s138
      %v143 = vadd.s32 %v142, %v140
      %v144 = vadd.s32 %v142, %v141
      %vm145 = vcmp.lt.s32.totalorder %v143, 16
      %vm146 = vcmp.lt.s32.totalorder %v144, 16
      %v147 = vld [vmem:[#allocation2] sm:$0xff]
      %v148 = vld [vmem:[#allocation2 + $0x8] sm:$0xff]
      %v149 = vsel %vm145, %v147, -10000.0
      %v150 = vsel %vm146, %v148, -10000.0
      %v151 = vld [vmem:[#allocation5] sm:$0xff]
      %v152 = vld [vmem:[#allocation5 + $0x8] sm:$0xff]
      %v153 = vsel %vm145, %v151, 0.0
      %v154 = vsel %vm146, %v152, 0.0
      %v155 = vld [vmem:[#allocation7] sm:$0xff]
      %v156 = vand.u32 2147483647, %v149
      %v157 = vand.u32 2147483647, %v150
      %v158 = vsub.f32 0.0, %v156
      %v159 = vsub.f32 0.0, %v157
      %v160 = vmul.f32 %v158, 1.442695
      %v161 = vpow.pop %v160
      %v162 = vmul.f32 %v159, 1.442695
      %v163 = vpow.pop %v162
      %v164 = vmax.f32 %v149, 0.0
      %v165 = vmax.f32 %v150, 0.0
      %v166 = vmul.f32 %v149, %v153
      %v167 = vmul.f32 %v150, %v154
      %v168 = vsub.f32 %v164, %v166
      %v169 = vsub.f32 %v165, %v167
      %v170 = vadd.f32 %v161, 1.0
      %v171 = vlog2.pop %v170
      %v172 = vmul.f32 %v171, 0.6931472
      %v173 = vmul.f32 -0.5, %v161
      %v174 = vadd.f32 %v173, 1.0
      %v175 = vmul.f32 %v174, %v161
      %v176 = vand.u32 2147483647, %v161
      %vm177 = vcmp.lt.f32.partialorder %v176, 0.0004427343
      %v178 = vsel %vm177, %v175, %v172
      %v179 = vadd.f32 %v163, 1.0
      %v180 = vlog2.pop %v179
      %v181 = vmul.f32 %v180, 0.6931472
      %v182 = vmul.f32 -0.5, %v163
      %v183 = vadd.f32 %v182, 1.0
      %v184 = vmul.f32 %v183, %v163
      %v185 = vand.u32 2147483647, %v163
      %vm186 = vcmp.lt.f32.partialorder %v185, 0.0004427343
      %v187 = vsel %vm186, %v184, %v181
      %v188 = vadd.f32 %v168, %v178
      %v189 = vadd.f32 %v169, %v187
      %v190 = vmul.f32 %v149, 0.5
      %v191 = vmul.f32 %v150, 0.5
      %v192 = vtanh.pop %v190
      %v193 = vtanh.pop %v191
      %v194 = vmul.f32 %v192, 0.5
      %v195 = vmul.f32 %v193, 0.5
      %v196 = vadd.f32 %v194, 0.5
      %v197 = vadd.f32 %v195, 0.5
      %v198 = vsub.f32 %v196, %v153
      %v199 = vsub.f32 %v197, %v154
      %v200 = vsub.f32 %v198, 1.0
      %v201 = vsub.f32 %v199, 1.0
      %v202 = vmul.f32 %v200, 19.96008
      %v203 = vmul.f32 %v201, 19.96008
      %v204 = vmul.f32 %v202, 1.442695
      %v205 = vpow.pop %v204
      %v206 = vmul.f32 %v203, 1.442695
      %v207 = vpow.pop %v206
      %v208 = vsub.f32 1.0, %v205
      %v209 = vsub.f32 1.0, %v207
      %v210 = vmul.f32 %v188, %v208
      %v211 = vmul.f32 %v189, %v209
      %v212 = vadd.f32 %v210, %v211
      %v213 = vadd.f32 %v155, %v212
      %214 = vst [vmem:[#allocation7] sm:$0xff] %v213
    $region29: #{tpu_custom_call.1} parent=1 // pred_fallthru
      _
    // Predicated region
    $region30: #{tpu_custom_call.1} parent=1 // pred_check
      _
    $region31: #{tpu_custom_call.1} parent=1 // pred_check_branch
      %216 = sbr.rel (0) target = $region33
    $region32: #{tpu_custom_call.1} parent=1 // pred_region
      %s218 = ssub.s32 128, 128
      %219 = vsyncadd [#allocation4], %s218
      %s221 = sshll.u32 [#allocation7], 4
      %s222 = int_to_ptr.vmem [resolvable:$true] %s221
      %224 = dma.vmem_to_hbm [thread:$0]  %s222, 128, %s2, [#allocation4]
    $region33: #{tpu_custom_call.1} parent=1 // pred_fallthru
      _
    // Predicated region
    $region34: #{tpu_custom_call.1} parent=1 // pred_check
      _
    $region35: #{tpu_custom_call.1} parent=1 // pred_check_branch
      %226 = sbr.rel (0) target = $region37
    $region36: #{tpu_custom_call.1} parent=1 // pred_region
      %227 = dma.done [#allocation4], 128
    $region37: #{tpu_custom_call.1} parent=1 // pred_fallthru
      _
    %228 = vsyncpa [#allocation3], 1
    %229 = vsyncpa [#allocation6], 1
    %230 = vsyncpa [#allocation4], 1

</llo_original>
